<compile_context>
chip_gen: v6e
topology: v6e:2x2x1
jax: 0.10.0
libtpu: 0.0.40
codegen_flags: <defaults>
</compile_context>

<pallas_src>
import functools

import jax
import jax.numpy as jnp
from jax.experimental import pallas as pl
from jax.experimental.pallas import tpu as pltpu


def _velocity_loss_kernel(p_ref, r_ref, acc_ref, *, n, col0, batch,
                          block_rows, acc_rows, blocks_per_core,
                          mask_threshold):
    """One (core, batch-block) grid step.

    p_ref, r_ref : (block_rows, W) lane-dense row blocks (native dtype);
                   columns [col0, col0+n) = frame T-2, [col0+n, col0+2n) = T-1.
    acc_ref      : (acc_rows, n) f32 per-core partial-sum slab, resident across
                   the inner ("arbitrary") grid axis.
    """
    c = pl.program_id(0)
    j = pl.program_id(1)

    @pl.when(j == 0)
    def _init():
        acc_ref[...] = jnp.zeros_like(acc_ref)

    # |(p_last - p_prev) - (r_last - r_prev)| == |(p - r)_last - (p - r)_prev|
    # -> one full-width VPU subtract, then two static lane slices.
    e = p_ref[...].astype(jnp.float32) - r_ref[...].astype(jnp.float32)
    d = jnp.abs(e[:, col0 + n:col0 + 2 * n] - e[:, col0:col0 + n])  # (tb, n)

    def _accumulate(vals):
        if block_rows != acc_rows:
            # Fold rows into the small accumulator with pure VPU adds.
            vals = vals.reshape(block_rows // acc_rows, acc_rows, n).sum(axis=0)
        acc_ref[...] += vals

    if mask_threshold is None:
        _accumulate(d)
    else:
        gb = c * blocks_per_core + j  # global batch-block index (unclamped)

        @pl.when(gb < mask_threshold)
        def _steady():
            _accumulate(d)

        @pl.when(gb >= mask_threshold)
        def _edge():
            row = gb * block_rows + jax.lax.broadcasted_iota(
                jnp.int32, (block_rows, 1), 0)
            _accumulate(jnp.where(row < batch, d, 0.0))


def velocity_loss(predict, real, config, *, block_rows=None):
    """Pallas implementation of VelocityLoss.forward.

    predict / real: any shape reshapable to (-1, T, V, 3); dtype preserved on
    the wire (e.g. bf16 stays bf16) and upcast to f32 inside the kernel.
    Returns a float32 scalar (0.0 if velocity_weight <= 0).
    """
    w = float(config["velocity_weight"])
    if w <= 0:
        return jnp.float32(0.0)

    t = int(config["num_consecutive_frames"])
    v = int(config["num_vertices"])
    assert t >= 2
    n = v * 3

    # ---- HBM row layout: always lane-dense, no sublane padding --------------
    if t <= 4:
        # Keep all T frames in the flat row: a free reshape of the original
        # input (no copy).  Extra DMA vs. the 2-frame minimum is <= 2x, which
        # beats an unfused slice copy (3x) and relies on nothing.
        p2 = jnp.reshape(predict, (-1, t * n))
        r2 = jnp.reshape(real, (-1, t * n))
        row_width = t * n
        col0 = (t - 2) * n
    else:
        # Single slice to the last two frames; allow_input_fusion lets XLA
        # fuse it into the pallas_call operand instead of materializing it.
        p3 = jnp.reshape(predict, (-1, t, n))
        r3 = jnp.reshape(real, (-1, t, n))
        p2 = jnp.reshape(jax.lax.slice_in_dim(p3, t - 2, t, axis=1), (-1, 2 * n))
        r2 = jnp.reshape(jax.lax.slice_in_dim(r3, t - 2, t, axis=1), (-1, 2 * n))
        row_width = 2 * n
        col0 = 0

    b = int(p2.shape[0])
    assert int(r2.shape[0]) == b

    # ---- batch tile: largest multiple of 8 that fits the VMEM budget --------
    itemsize = jnp.dtype(p2.dtype).itemsize
    lanes = ((row_width + 127) // 128) * 128
    n_pad = ((n + 127) // 128) * 128
    acc_bytes = 2 * 8 * n_pad * 4                    # resident f32 slab (x2 margin)
    per_row = 2 * 2 * lanes * itemsize               # 2 tensors x 2 pipeline bufs
    vmem_budget = 24 * 1024 * 1024
    tb_fit = max(8, ((vmem_budget - acc_bytes) // per_row) // 8 * 8)

    if b >= 8:
        cap = (b // 8) * 8                           # keep the block inside B
        req = block_rows if block_rows is not None else tb_fit
        tb = max(8, min((int(req) // 8) * 8, cap, tb_fit))
        acc_rows = 8
    else:
        tb = b                                       # block == full batch dim
        acc_rows = b

    num_blocks = pl.cdiv(b, tb)
    num_cores = 2 if num_blocks >= 2 else 1          # v7x 2-TC split; serial elsewhere
    bpc = pl.cdiv(num_blocks, num_cores)

    # Only tail / phantom blocks need row masking.
    if b % tb == 0 and num_cores * bpc == num_blocks:
        mask_threshold = None
    elif b % tb == 0:
        mask_threshold = num_blocks                  # only phantom blocks masked
    else:
        mask_threshold = num_blocks - 1              # tail (+ phantom) masked

    if num_cores * bpc == num_blocks:
        def in_index(c, j):
            return (c * bpc + j, 0)
    else:
        # Phantom blocks re-read the last real block (fully masked in-kernel).
        def in_index(c, j):
            return (jnp.minimum(c * bpc + j, num_blocks - 1), 0)

    kernel = functools.partial(
        _velocity_loss_kernel, n=n, col0=col0, batch=b, block_rows=tb,
        acc_rows=acc_rows, blocks_per_core=bpc, mask_threshold=mask_threshold)

    need = tb * per_row + acc_bytes + (2 << 20)
    vmem_limit = int(min(48 * 1024 * 1024, max(32 * 1024 * 1024, need)))

    acc = pl.pallas_call(
        kernel,
        out_shape=jax.ShapeDtypeStruct((num_cores, acc_rows, n), jnp.float32),
        grid_spec=pltpu.PrefetchScalarGridSpec(
            num_scalar_prefetch=0,
            grid=(num_cores, bpc),
            in_specs=[
                pl.BlockSpec((tb, row_width), in_index),
                pl.BlockSpec((tb, row_width), in_index),
            ],
            out_specs=pl.BlockSpec((None, acc_rows, n), lambda c, j: (c, 0, 0)),
        ),
        compiler_params=pltpu.CompilerParams(
            dimension_semantics=("parallel", "arbitrary"),
            vmem_limit_bytes=vmem_limit,
            allow_input_fusion=[True, True],
        ),
    )(p2, r2)

    # Finalize: tiny (num_cores, 8, n) reduction + scale in the wrapper.
    scale = w / float(b * n)
    return (scale * jnp.sum(acc)).astype(jnp.float32)


def _velocity_loss_ref(predict, real, config):
    """Pure-JAX reference mirroring the PyTorch forward."""
    t = config["num_consecutive_frames"]
    v = config["num_vertices"]
    vp = jnp.reshape(predict, (-1, t, v, 3)).astype(jnp.float32)
    vr = jnp.reshape(real, (-1, t, v, 3)).astype(jnp.float32)
    vel_p = vp[:, -1, :, :] - vp[:, -2, :, :]
    vel_r = vr[:, -1, :, :] - vr[:, -2, :, :]
    return config["velocity_weight"] * jnp.mean(jnp.abs(vel_p - vel_r))


if __name__ == "__main__":
    key = jax.random.PRNGKey(0)

    cases = [
        # name, cfg, batch, dtype, block_rows
        ("t2_f32", dict(velocity_weight=0.5, num_consecutive_frames=2,
                        num_vertices=16), 16, jnp.float32, None),
        ("t3_tail", dict(velocity_weight=1.25, num_consecutive_frames=3,
                         num_vertices=20), 20, jnp.float32, 8),
        ("t6_small", dict(velocity_weight=0.75, num_consecutive_frames=6,
                          num_vertices=11), 5, jnp.float32, None),
        ("t2_bf16", dict(velocity_weight=2.0, num_consecutive_frames=2,
                         num_vertices=16), 12, jnp.bfloat16, None),
    ]

    for name, cfg, b, dtype, br in cases:
        t, v = cfg["num_consecutive_frames"], cfg["num_vertices"]
        key, k1, k2 = jax.random.split(key, 3)
        predict = jax.random.normal(
            k1, (b, t * v * 3), dtype=jnp.float32).astype(dtype)
        real = jax.random.normal(
            k2, (b, t * v * 3), dtype=jnp.float32).astype(dtype)
        out = jax.block_until_ready(
            velocity_loss(predict, real, cfg, block_rows=br))
        ref = _velocity_loss_ref(predict, real, cfg)
        assert jnp.allclose(out, ref, rtol=2e-5, atol=1e-5), (name, out, ref)

    # Disabled-weight branch keeps a consistent return type.
    cfg_off = dict(velocity_weight=0.0, num_consecutive_frames=2,
                   num_vertices=16)
    dummy = jnp.ones((4, 2 * 16 * 3), jnp.float32)
    off = velocity_loss(dummy, dummy, cfg_off)
    assert float(off) == 0.0

    print("KERNEL_OK")
</pallas_src>

<mosaic_0001>
module attributes {stable_mosaic.version = 11 : i64} {
  func.func @_velocity_loss_kernel(%arg0: i32, %arg1: i32, %arg2: memref<16x96xf32, #tpu.memory_space<vmem>>, %arg3: memref<16x96xf32, #tpu.memory_space<vmem>>, %arg4: memref<1x8x48xf32, #tpu.memory_space<vmem>>) attributes {dimension_semantics = [#tpu.dimension_semantics<parallel>, #tpu.dimension_semantics<arbitrary>], iteration_bounds = array<i64: 1, 1>, scalar_prefetch = 0 : i64, scratch_operands = 0 : i64, tpu.core_type = #tpu.core_type<tc>, window_params = [{transform_indices = @transform_0, window_bounds = array<i64: 16, 96>}, {transform_indices = @transform_1, window_bounds = array<i64: 16, 96>}, {transform_indices = @transform_2, window_bounds = array<i64: 1, 8, 48>}]} {
    %c0_i32 = arith.constant 0 : i32
    %0 = arith.cmpi eq, %arg1, %c0_i32 : i32
    %1 = arith.extui %0 : i1 to i32
    %c0_i32_0 = arith.constant 0 : i32
    %2 = arith.cmpi ne, %1, %c0_i32_0 : i32
    scf.if %2 {
      %cst_10 = arith.constant 0.000000e+00 : f32
      %18 = vector.broadcast %cst_10 : f32 to vector<8x48xf32>
      %c0_11 = arith.constant 0 : index
      %c0_12 = arith.constant 0 : index
      %c0_13 = arith.constant 0 : index
      %19 = vector.load %arg4[%c0_11, %c0_12, %c0_13] : memref<1x8x48xf32, #tpu.memory_space<vmem>>, vector<1x8x48xf32>
      %20 = vector.shape_cast %19 : vector<1x8x48xf32> to vector<8x48xf32>
      %21 = vector.shape_cast %18 : vector<8x48xf32> to vector<1x8x48xf32>
      tpu.vector_store %arg4[%c0_11, %c0_12, %c0_13], %21 {strides = array<i32>} : memref<1x8x48xf32, #tpu.memory_space<vmem>>, vector<1x8x48xf32>,
    } else {
    }
    %c0 = arith.constant 0 : index
    %c0_1 = arith.constant 0 : index
    %3 = vector.load %arg2[%c0, %c0_1] : memref<16x96xf32, #tpu.memory_space<vmem>>, vector<16x96xf32>
    %c0_2 = arith.constant 0 : index
    %c0_3 = arith.constant 0 : index
    %4 = vector.load %arg3[%c0_2, %c0_3] : memref<16x96xf32, #tpu.memory_space<vmem>>, vector<16x96xf32>
    %5 = arith.subf %3, %4 : vector<16x96xf32>
    %6 = vector.extract_strided_slice %5 {offsets = [0, 48], sizes = [16, 48], strides = [1, 1]} : vector<16x96xf32> to vector<16x48xf32>
    %7 = vector.extract_strided_slice %5 {offsets = [0, 0], sizes = [16, 48], strides = [1, 1]} : vector<16x96xf32> to vector<16x48xf32>
    %8 = arith.subf %6, %7 : vector<16x48xf32>
    %9 = math.absf %8 : vector<16x48xf32>
    %10 = vector.shape_cast %9 : vector<16x48xf32> to vector<2x8x48xf32>
    %cst = arith.constant dense<0.000000e+00> : vector<8x48xf32>
    %11 = vector.multi_reduction <add>, %10, %cst [0] : vector<2x8x48xf32> to vector<8x48xf32>
    %c0_4 = arith.constant 0 : index
    %c0_5 = arith.constant 0 : index
    %c0_6 = arith.constant 0 : index
    %12 = vector.load %arg4[%c0_4, %c0_5, %c0_6] : memref<1x8x48xf32, #tpu.memory_space<vmem>>, vector<1x8x48xf32>
    %13 = vector.shape_cast %12 : vector<1x8x48xf32> to vector<8x48xf32>
    %14 = arith.addf %13, %11 : vector<8x48xf32>
    %c0_7 = arith.constant 0 : index
    %c0_8 = arith.constant 0 : index
    %c0_9 = arith.constant 0 : index
    %15 = vector.load %arg4[%c0_7, %c0_8, %c0_9] : memref<1x8x48xf32, #tpu.memory_space<vmem>>, vector<1x8x48xf32>
    %16 = vector.shape_cast %15 : vector<1x8x48xf32> to vector<8x48xf32>
    %17 = vector.shape_cast %14 : vector<8x48xf32> to vector<1x8x48xf32>
    tpu.vector_store %arg4[%c0_7, %c0_8, %c0_9], %17 {strides = array<i32>} : memref<1x8x48xf32, #tpu.memory_space<vmem>>, vector<1x8x48xf32>,
    return
  }
  func.func @transform_0(%arg0: i32, %arg1: i32) -> (i32, i32) {
    %c1_i32 = arith.constant 1 : i32
    %0 = arith.muli %arg0, %c1_i32 : i32
    %1 = arith.addi %0, %arg1 : i32
    %c0_i32 = arith.constant 0 : i32
    %c0_i32_0 = arith.constant 0 : i32
    return %1, %c0_i32 : i32, i32
  }
  func.func @transform_1(%arg0: i32, %arg1: i32) -> (i32, i32) {
    %c1_i32 = arith.constant 1 : i32
    %0 = arith.muli %arg0, %c1_i32 : i32
    %1 = arith.addi %0, %arg1 : i32
    %c0_i32 = arith.constant 0 : i32
    %c0_i32_0 = arith.constant 0 : i32
    return %1, %c0_i32 : i32, i32
  }
  func.func @transform_2(%arg0: i32, %arg1: i32) -> (i32, i32, i32) {
    %c0_i32 = arith.constant 0 : i32
    %c0_i32_0 = arith.constant 0 : i32
    %c0_i32_1 = arith.constant 0 : i32
    return %arg0, %c0_i32, %c0_i32_0 : i32, i32, i32
  }
}

</mosaic_0001>

<llo_original>
// kernel: tpu_custom_call.1
$region0: #{tpu_custom_call.1}
  #allocation0 [shape = 'u32[]', space=smem, size = 0x4, offset = 0x4, fixed_abs, tag = 'smem constant byte address 0x4 - core index']
  #allocation1 [shape = 'u32[144,128]{1,0:T(1,128)}', space=vmem, size = 0x12000, scoped, tag = 'internal scratch']
  %s0 = inlined_call_operand.hbm [shape: f32[16,96], index: 0, kind: input, shape index: {}]
  %s1 = inlined_call_operand.hbm [shape: f32[16,96], index: 1, kind: input, shape index: {}]
  %s2 = inlined_call_operand.hbm [shape: f32[1,8,48], index: 2, kind: output, shape index: {}]
  %s3 = sld [smem:[#allocation0]]
  $region30: #{tpu_custom_call.1} parent=0
    _
  %s5 = ssub.s32 1, %s3
  %s6 = scalar_select 0, %s5, %s3
  $region1: #{tpu_custom_call.1} parent=0
    #allocation2 [shape = 'u8[8192]{0}', space=vmem, size = 0x2000, scoped, tag = 'input window, operand 0, single buffered']
    #allocation3 [shape = 's32[1]{0}', space=sflag, size = 0x4, scoped, tag = 'scoped memory for tpu_custom_call.1']
    #allocation4 [shape = 's32[1]{0}', space=sflag, size = 0x4, scoped, tag = 'scoped memory for tpu_custom_call.1']
    #allocation5 [shape = 'u8[8192]{0}', space=vmem, size = 0x2000, scoped, tag = 'input window, operand 1, single buffered']
    #allocation6 [shape = 's32[1]{0}', space=sflag, size = 0x4, scoped, tag = 'scoped memory for tpu_custom_call.1']
    #allocation7 [shape = 'u8[4096]{0}', space=vmem, size = 0x1000, scoped, tag = 'output window, operand 0, single buffered']
    %7 = vsyncpa [#allocation3], 0
    %8 = vsyncpa [#allocation6], 0
    %9 = vsyncpa [#allocation4], 0
    // Predicated region
    $region2: #{tpu_custom_call.1} parent=1 // pred_check
      _
    $region3: #{tpu_custom_call.1} parent=1 // pred_check_branch
      %11 = sbr.rel (0) target = $region5
    $region4: #{tpu_custom_call.1} parent=1 // pred_region
      %s12 = sadd.s32 0, 0
      %s13 = smul.u32 2, %s12
      %s15 = ssub.s32 256, 256
      %16 = vsyncadd [#allocation3], %s15
      %s17 = smul.addr %s13, 128
      %s18 = scalar_lea.hbm %s0, %s17
      %s19 = sshll.u32 [#allocation2], 4
      %s20 = int_to_ptr.vmem [resolvable:$true] %s19
      %25 = dma.hbm_to_vmem [thread:$0]  %s18, 256, %s20, [#allocation3], 128, 128, 8
    $region5: #{tpu_custom_call.1} parent=1 // pred_fallthru
      _
    // Predicated region
    $region6: #{tpu_custom_call.1} parent=1 // pred_check
      _
    $region7: #{tpu_custom_call.1} parent=1 // pred_check_branch
      %27 = sbr.rel (0) target = $region9
    $region8: #{tpu_custom_call.1} parent=1 // pred_region
      %s28 = sadd.s32 0, 0
      %s29 = smul.u32 2, %s28
      %s31 = ssub.s32 256, 256
      %32 = vsyncadd [#allocation6], %s31
      %s33 = smul.addr %s29, 128
      %s34 = scalar_lea.hbm %s1, %s33
      %s35 = sshll.u32 [#allocation5], 4
      %s36 = int_to_ptr.vmem [resolvable:$true] %s35
      %41 = dma.hbm_to_vmem [thread:$0]  %s34, 256, %s36, [#allocation6], 128, 128, 8
    $region9: #{tpu_custom_call.1} parent=1 // pred_fallthru
      _
    // Predicated region
    $region10: #{tpu_custom_call.1} parent=1 // pred_check
      _
    $region11: #{tpu_custom_call.1} parent=1 // pred_check_branch
      %43 = sbr.rel (0) target = $region13
    $region12: #{tpu_custom_call.1} parent=1 // pred_region
      %44 = dma.done [#allocation3], 256
    $region13: #{tpu_custom_call.1} parent=1 // pred_fallthru
      _
    // Predicated region
    $region14: #{tpu_custom_call.1} parent=1 // pred_check
      _
    $region15: #{tpu_custom_call.1} parent=1 // pred_check_branch
      %46 = sbr.rel (0) target = $region17
    $region16: #{tpu_custom_call.1} parent=1 // pred_region
      %47 = dma.done [#allocation6], 256
    $region17: #{tpu_custom_call.1} parent=1 // pred_fallthru
      _
    %s48 = sadd.s32 0, 0
    %s49 = smul.u32 2, %s48
    %s50 = sadd.s32 0, 0
    %s51 = smul.u32 2, %s50
    %p52 = scmp.eq.s32.totalorder 0, 0
    // Predicated region
    $region18: #{tpu_custom_call.1} parent=1 // pred_check
      %p53 = pneg %p52
    $region19: #{tpu_custom_call.1} parent=1 // pred_check_branch
      %55 = sbr.rel (%p53) target = $region21
    $region20: #{tpu_custom_call.1} parent=1 // pred_region
      %vm56 = vcmask 392192
      %57 = vst.msk [vmem:[#allocation7] sm:$0xff] %vm56, 0.0
    $region21: #{tpu_custom_call.1} parent=1 // pred_fallthru
      _
    %v58 = vld [vmem:[#allocation2] sm:$0xff]
    %v59 = vld [vmem:[#allocation2 + $0x8] sm:$0xff]
    %v60 = vld [vmem:[#allocation5] sm:$0xff]
    %v61 = vld [vmem:[#allocation5 + $0x8] sm:$0xff]
    %v62 = vsub.f32 %v58, %v60
    %v63 = vsub.f32 %v59, %v61
    %66 = vrot.lane.b32.xlu0 %v62, 48
    %v67 = vpop.permute.xlu0 %66
    %68 = vrot.lane.b32.xlu0 %v63, 48
    %v69 = vpop.permute.xlu0 %68
    %v72 = vsub.f32 %v62, %v67
    %v73 = vsub.f32 %v63, %v69
    %v74 = vand.u32 2147483647, %v72
    %v75 = vand.u32 2147483647, %v73
    %vm76 = vcmask 785792
    %v77 = vsel %vm76, %v74, 0.0
    %v78 = vsel %vm76, %v75, 0.0
    %v79 = vadd.f32 %v77, %v78
    %v80 = vld [vmem:[#allocation7] sm:$0xff]
    %82 = vrot.lane.b32.xlu0 %v79, 80
    %v83 = vpop.permute.xlu0 %82
    %v85 = vadd.f32 %v80, %v83
    %vm86 = vcmask 392192
    %87 = vst.msk [vmem:[#allocation7] sm:$0xff] %vm86, %v85
    // Predicated region
    $region22: #{tpu_custom_call.1} parent=1 // pred_check
      _
    $region23: #{tpu_custom_call.1} parent=1 // pred_check_branch
      %89 = sbr.rel (0) target = $region25
    $region24: #{tpu_custom_call.1} parent=1 // pred_region
      %s91 = ssub.s32 128, 128
      %92 = vsyncadd [#allocation4], %s91
      %s94 = sshll.u32 [#allocation7], 4
      %s95 = int_to_ptr.vmem [resolvable:$true] %s94
      %97 = dma.vmem_to_hbm [thread:$0]  %s95, 128, %s2, [#allocation4]
    $region25: #{tpu_custom_call.1} parent=1 // pred_fallthru
      _
    // Predicated region
    $region26: #{tpu_custom_call.1} parent=1 // pred_check
      _
    $region27: #{tpu_custom_call.1} parent=1 // pred_check_branch
      %99 = sbr.rel (0) target = $region29
    $region28: #{tpu_custom_call.1} parent=1 // pred_region
      %100 = dma.done [#allocation4], 128
    $region29: #{tpu_custom_call.1} parent=1 // pred_fallthru
      _
    %101 = vsyncpa [#allocation3], 1
    %102 = vsyncpa [#allocation6], 1
    %103 = vsyncpa [#allocation4], 1

</llo_original>
